<compile_context>
chip_gen: v5e
topology: v5e:2x2
jax: 0.10.0
libtpu: 0.0.40
codegen_flags: <defaults>
</compile_context>

<pallas_src>
import functools

import numpy as np
import jax
import jax.numpy as jnp
from jax import lax
from jax.experimental import pallas as pl
from jax.experimental.pallas import tpu as pltpu

# ---------------- model configuration (consistent with the module) ----------------
BATCH = 4
PAD_B = 8                 # pad batch to the 8-sublane granularity
INPUT_DIM = 32            # c.model_params.model_input
HIDDEN = 64               # hidden_size
CH_1 = 4
CH_2 = 8
CH_3 = 8                  # CH_3 == CH_2 so `conv2(x) * x` broadcasts (as in the reference cfg)
N_CLASS = 1
SEQ_LEN = HIDDEN // CH_1              # 16 : length after .view(B, ch_1, -1)
CH_PO_1 = HIDDEN // CH_1 // 2         # 8  : AdaptiveAvgPool1d output size
POOL_LEN = CH_PO_1 // 2               # 4  : length after MaxPool1d(k=4,s=2,p=1)
CH_PO_2 = POOL_LEN * CH_3             # 32 : flattened head input
FLAT_Z = CH_3 * CH_PO_1               # 64 : flat width of the pre-pool activation
LANES = 128                           # lane-dense width used by every kernel stage
LEAKY_SLOPE = 0.01
BN_EPS = 1e-5
NEG = -1e30               # finite stand-in for PyTorch's -inf maxpool padding

# Weight-slab row layout. Each operator is zero-padded to 128 output lanes (and its
# reserved block to 128 input rows). Zero-padded input rows only ever multiply lanes
# that are exactly zero, and zero output columns + zero bias stay exactly zero through
# SiLU/LeakyReLU, so the whole pipeline is sliced only with tile-aligned static views.
ROW_A = 0        # WA : (32 ,  64) expand            rows   0: 32
ROW_B = 32       # WB : (64 , 128) conv1a            rows  32:160 (real rows 32:96)
ROW_C = 160      # WC : (128,  64) avgpool+conv1b    rows 160:288
ROW_D = 288      # WD : (64 ,  64) conv2a            rows 288:416 (real rows 288:352)
ROW_E = 416      # WE : (64 ,  64) conv2b            rows 416:544 (real rows 416:480)
W_ROWS = 544

# Bias/head slab row layout ((8,128) f32, exactly one VMEM tile).
B_ROW_A, B_ROW_B, B_ROW_C, B_ROW_D, B_ROW_E, B_ROW_HW = 0, 1, 2, 3, 4, 5


# ---------------- in-kernel helpers ----------------
def _leaky_relu(x):
    return jnp.where(x > 0, x, LEAKY_SLOPE * x)


# ---------------- the single fused kernel ----------------
def fused_kernel(x_ref, w_ref, b_ref, o_ref, *, hb):
    # static, tile-aligned views into the packed bf16 weight slab (free)
    wa = w_ref[ROW_A:ROW_B, :]        # (32 ,128)
    wb = w_ref[ROW_B:ROW_C, :]        # (128,128)
    wc = w_ref[ROW_C:ROW_D, :]        # (128,128)
    wd = w_ref[ROW_D:ROW_E, :]        # (128,128)
    we = w_ref[ROW_E:W_ROWS, :]       # (128,128)

    xb = x_ref[...].astype(jnp.bfloat16)                                   # (8, 32)

    # expand: BN(input) . Linear(32,64) folded into WA/bA, then SiLU       -> (8, 128)
    h = jnp.dot(xb, wa, preferred_element_type=jnp.float32) + b_ref[B_ROW_A:B_ROW_A + 1, :]
    h = h * pl.reciprocal(1.0 + jnp.exp(-h), approx=True)                  # SiLU (EUP recip)
    # conv1a: BN(ch_1) . Conv1d(4->8,k5,p2,no bias) folded into WB/bB      -> (8, 128)
    t = _leaky_relu(jnp.dot(h.astype(jnp.bfloat16), wb,
                            preferred_element_type=jnp.float32) + b_ref[B_ROW_B:B_ROW_B + 1, :])
    # conv1b: AvgPool(16->8) . BN(ch_2) . Conv1d(8->8,k3,p1) -> WC/bC      -> (8, 128)
    xc1 = _leaky_relu(jnp.dot(t.astype(jnp.bfloat16), wc,
                              preferred_element_type=jnp.float32) + b_ref[B_ROW_C:B_ROW_C + 1, :])
    # conv2a: BN . Conv1d(8->8,k3,p1) -> WD/bD                             -> (8, 128)
    v = _leaky_relu(jnp.dot(xc1.astype(jnp.bfloat16), wd,
                            preferred_element_type=jnp.float32) + b_ref[B_ROW_D:B_ROW_D + 1, :])
    # conv2b: BN . Conv1d(8->8,k5,p2) -> WE/bE                             -> (8, 128)
    w = _leaky_relu(jnp.dot(v.astype(jnp.bfloat16), we,
                            preferred_element_type=jnp.float32) + b_ref[B_ROW_E:B_ROW_E + 1, :])
    z = w * xc1                      # conv2(x) * x ; lanes 0:64 real, lanes 64:128 exactly 0

    # MaxPool1d(k=4, s=2, p=1): the pooled value for (channel c, out pos lo) lives at
    # flat lane f = c*8 + 2*lo and is max(z[f-1], z[f], z[f+1], z[f+2]).
    # Cross-channel / wrapped-around candidates are killed by additive -1e30 masks; lanes
    # that are not pooled outputs (odd lanes, lanes >= 64) are multiplied by hw=0 in the
    # head, so the -1e30 / wrap garbage never reaches the output.
    lane = lax.broadcasted_iota(jnp.int32, (1, LANES), 1)
    mod8 = jnp.bitwise_and(lane, CH_PO_1 - 1)
    m_m1 = jnp.where(mod8 == 0, NEG, 0.0).astype(jnp.float32)              # f-1 leaves channel
    m_p2 = jnp.where(mod8 >= CH_PO_1 - 2, NEG, 0.0).astype(jnp.float32)    # f+2 leaves channel

    z_m1 = pltpu.roll(z, 1, 1) + m_m1          # result[f] = z[f-1]
    z_p1 = pltpu.roll(z, LANES - 1, 1)         # result[f] = z[f+1]
    z_p2 = pltpu.roll(z, LANES - 2, 1) + m_p2  # result[f] = z[f+2]
    pooled = jnp.maximum(jnp.maximum(z, z_p1), jnp.maximum(z_m1, z_p2))

    # head: Flatten . BN(32) . Linear(32,1) folded into hw (expanded to the 128-lane
    # pre-pool layout, zero at odd/unused lanes) + hb; VPU multiply + XLU lane reduce.
    o_ref[...] = jnp.sum(pooled * b_ref[B_ROW_HW:B_ROW_HW + 1, :], axis=1, keepdims=True) + hb


# ---------------- pallas_call wrapper ----------------
def one_d_cnn_forward(ops, x):
    b = x.shape[0]
    xp = jnp.zeros((PAD_B, INPUT_DIM), jnp.float32).at[:b, :].set(x.astype(jnp.float32))
    kernel = functools.partial(fused_kernel, hb=ops['hb'])   # hb is a Python float
    flops = 2 * PAD_B * (INPUT_DIM * LANES + 4 * LANES * LANES)
    bytes_accessed = (W_ROWS * LANES * 2 + 8 * LANES * 4
                      + PAD_B * INPUT_DIM * 4 + PAD_B * 4)
    out = pl.pallas_call(
        kernel,
        out_shape=jax.ShapeDtypeStruct((PAD_B, 1), jnp.float32),
        in_specs=[pl.BlockSpec(memory_space=pltpu.MemorySpace.VMEM)] * 3,
        out_specs=pl.BlockSpec(memory_space=pltpu.MemorySpace.VMEM),
        cost_estimate=pl.CostEstimate(flops=flops,
                                      transcendentals=PAD_B * LANES,
                                      bytes_accessed=bytes_accessed),
    )(xp, ops['wslab'], ops['bslab'])
    return out[:b, 0]                               # .squeeze(1)
    # TODO(synk): if batch ever grows large, add a 1-D batch grid with
    # dimension_semantics=("parallel",) so both v7x TensorCores are used.


# ---------------- host-side operator folding ----------------
def _conv_matrix(w, L, pad):
    """Dense operator for PyTorch Conv1d (cross-correlation), stride 1, same length.
    w: (K, Cout, Cin).  M[ci*L+li, co*L+lo] = w[li-lo+pad, co, ci] if 0<=li-lo+pad<K."""
    K, Co, Ci = w.shape
    li = np.arange(L)[:, None]
    lo = np.arange(L)[None, :]
    k = li - lo + pad
    valid = (k >= 0) & (k < K)
    taps = w[np.clip(k, 0, K - 1)] * valid[:, :, None, None]    # (L, L, Co, Ci)
    return taps.transpose(3, 0, 2, 1).reshape(Ci * L, Co * L)


def _avgpool_matrix(C, Lin):
    """(C*Lin, C*Lout) operator: AdaptiveAvgPool1d(Lin -> Lin//2) == k2/s2 average."""
    Lout = Lin // 2
    P = np.zeros((C * Lin, C * Lout))
    for c in range(C):
        for j in range(Lout):
            P[c * Lin + 2 * j, c * Lout + j] = 0.5
            P[c * Lin + 2 * j + 1, c * Lout + j] = 0.5
    return P


def _fold_bn_conv(scale, shift, L_in, M_raw, conv_bias, L_out):
    """Fold a per-channel eval-mode BN (scale, shift) applied before conv operator M_raw."""
    s = np.repeat(scale, L_in)
    sh = np.repeat(shift, L_in)
    W = s[:, None] * M_raw
    b = sh @ M_raw
    if conv_bias is not None:
        b = b + np.repeat(conv_bias, L_out)
    return W, b


def build_operators(raw):
    r = {k: np.asarray(v, np.float64) for k, v in raw.items()}

    # expand: BN(input) . Linear(input, hidden)
    WA = r['bn0_scale'][:, None] * r['w1']
    bA = r['bn0_shift'] @ r['w1'] + r['b1']
    # conv1a: BN(ch_1) . Conv1d(ch_1->ch_2, k5, p2, no bias) on L=16
    MB = _conv_matrix(r['wc1'], SEQ_LEN, 2)
    WB, bB = _fold_bn_conv(r['bn1_scale'], r['bn1_shift'], SEQ_LEN, MB, None, SEQ_LEN)
    # conv1b: AvgPool(16->8) . BN(ch_2) . Conv1d(ch_2->ch_2, k3, p1, bias) on L=8
    MC = _conv_matrix(r['wc2'], CH_PO_1, 1)
    WC_, bC = _fold_bn_conv(r['bn2_scale'], r['bn2_shift'], CH_PO_1, MC, r['bc2'], CH_PO_1)
    WC = _avgpool_matrix(CH_2, SEQ_LEN) @ WC_
    # conv2a: BN(ch_2) . Conv1d(ch_2->ch_2, k3, p1, bias)
    MD = _conv_matrix(r['wc3'], CH_PO_1, 1)
    WD, bD = _fold_bn_conv(r['bn3_scale'], r['bn3_shift'], CH_PO_1, MD, r['bc3'], CH_PO_1)
    # conv2b: BN(ch_2) . Conv1d(ch_2->ch_3, k5, p2, bias)
    ME = _conv_matrix(r['wc4'], CH_PO_1, 2)
    WE, bE = _fold_bn_conv(r['bn4_scale'], r['bn4_shift'], CH_PO_1, ME, r['bc4'], CH_PO_1)

    # head: Flatten . BN(ch_po_2) . Linear(ch_po_2, 1); expand weights to the 128-lane
    # pre-pool layout: pooled value (c, lo) lives at flat lane c*CH_PO_1 + 2*lo; every
    # other lane (odd lanes, lanes >= FLAT_Z) gets weight 0.
    hw_eff = r['bn5_scale'] * r['wh'][:, 0]
    hb_eff = float(r['bn5_shift'] @ r['wh'][:, 0] + r['bh'][0])
    hw128 = np.zeros(LANES)
    for c in range(CH_3):
        for lo in range(POOL_LEN):
            hw128[c * CH_PO_1 + 2 * lo] = hw_eff[c * POOL_LEN + lo]

    # pack all five operator matrices into one zero-padded bf16 slab (544, 128)
    wslab = np.zeros((W_ROWS, LANES), np.float32)
    wslab[ROW_A:ROW_A + INPUT_DIM, :HIDDEN] = WA                   # (32, 64)
    wslab[ROW_B:ROW_B + HIDDEN, :CH_2 * SEQ_LEN] = WB              # (64, 128)
    wslab[ROW_C:ROW_C + CH_2 * SEQ_LEN, :CH_2 * CH_PO_1] = WC      # (128, 64)
    wslab[ROW_D:ROW_D + CH_2 * CH_PO_1, :CH_2 * CH_PO_1] = WD      # (64, 64)
    wslab[ROW_E:ROW_E + CH_2 * CH_PO_1, :CH_3 * CH_PO_1] = WE      # (64, 64)

    # pack all biases + expanded head weights into one (8, 128) f32 slab (one VMEM tile)
    bslab = np.zeros((8, LANES), np.float32)
    bslab[B_ROW_A, :HIDDEN] = bA
    bslab[B_ROW_B, :CH_2 * SEQ_LEN] = bB
    bslab[B_ROW_C, :CH_2 * CH_PO_1] = bC
    bslab[B_ROW_D, :CH_2 * CH_PO_1] = bD
    bslab[B_ROW_E, :CH_3 * CH_PO_1] = bE
    bslab[B_ROW_HW, :] = hw128

    return {
        'wslab': jnp.asarray(wslab, dtype=jnp.bfloat16),
        'bslab': jnp.asarray(bslab, dtype=jnp.float32),
        'hb': hb_eff,                                   # Python float, baked into kernel
    }


# ---------------- deterministic raw parameter init (eval-mode BN folded) ----------------
def _make_bn(key, c):
    k1, k2, k3, k4 = jax.random.split(key, 4)
    gamma = 1.0 + 0.1 * jax.random.normal(k1, (c,), jnp.float32)
    beta = 0.1 * jax.random.normal(k2, (c,), jnp.float32)
    mean = 0.1 * jax.random.normal(k3, (c,), jnp.float32)
    var = jax.random.uniform(k4, (c,), jnp.float32, 0.5, 1.5)
    scale = gamma / jnp.sqrt(var + BN_EPS)
    shift = beta - mean * scale
    return scale, shift


def init_raw_params(key):
    keys = jax.random.split(key, 16)
    p = {}
    p['bn0_scale'], p['bn0_shift'] = _make_bn(keys[0], INPUT_DIM)
    # weight_norm layers are represented by their effective (folded) weights
    p['w1'] = jax.random.normal(keys[1], (INPUT_DIM, HIDDEN), jnp.float32) / jnp.sqrt(INPUT_DIM)
    p['b1'] = 0.1 * jax.random.normal(keys[2], (HIDDEN,), jnp.float32)
    p['bn1_scale'], p['bn1_shift'] = _make_bn(keys[3], CH_1)
    p['wc1'] = jax.random.normal(keys[4], (5, CH_2, CH_1), jnp.float32) / jnp.sqrt(CH_1 * 5)
    p['bn2_scale'], p['bn2_shift'] = _make_bn(keys[5], CH_2)
    p['wc2'] = jax.random.normal(keys[6], (3, CH_2, CH_2), jnp.float32) / jnp.sqrt(CH_2 * 3)
    p['bc2'] = 0.1 * jax.random.normal(keys[7], (CH_2,), jnp.float32)
    p['bn3_scale'], p['bn3_shift'] = _make_bn(keys[8], CH_2)
    p['wc3'] = jax.random.normal(keys[9], (3, CH_2, CH_2), jnp.float32) / jnp.sqrt(CH_2 * 3)
    p['bc3'] = 0.1 * jax.random.normal(keys[10], (CH_2,), jnp.float32)
    p['bn4_scale'], p['bn4_shift'] = _make_bn(keys[11], CH_2)
    p['wc4'] = jax.random.normal(keys[12], (5, CH_3, CH_2), jnp.float32) / jnp.sqrt(CH_2 * 5)
    p['bc4'] = 0.1 * jax.random.normal(keys[13], (CH_3,), jnp.float32)
    p['bn5_scale'], p['bn5_shift'] = _make_bn(keys[14], CH_PO_2)
    kw, _ = jax.random.split(keys[15])
    p['wh'] = jax.random.normal(kw, (CH_PO_2, N_CLASS), jnp.float32) / jnp.sqrt(CH_PO_2)
    p['bh'] = jnp.zeros((N_CLASS,), jnp.float32)
    return p


# ---------------- numpy reference (checks kernel vs. module semantics) ----------------
def reference_forward(raw, x):
    r = {k: np.asarray(v, np.float64) for k, v in raw.items()}
    x = np.asarray(x, np.float64)
    leaky = lambda a: np.where(a > 0, a, LEAKY_SLOPE * a)

    def conv1d(v, w, bias, pad):                       # v (B,Ci,L), w (K,Co,Ci)
        B, Ci, L = v.shape
        K, Co, _ = w.shape
        vp = np.zeros((B, Ci, L + 2 * pad)); vp[:, :, pad:pad + L] = v
        out = np.zeros((B, Co, L))
        for k in range(K):
            out += np.einsum('oc,bcl->bol', w[k], vp[:, :, k:k + L])
        if bias is not None:
            out += bias.reshape(1, Co, 1)
        return out

    bn3d = lambda v, s, sh: v * s.reshape(1, -1, 1) + sh.reshape(1, -1, 1)

    h = (x * r['bn0_scale'] + r['bn0_shift']) @ r['w1'] + r['b1']
    h = h / (1.0 + np.exp(-h))                                            # SiLU
    h3 = h.reshape(-1, CH_1, SEQ_LEN)
    t = leaky(conv1d(bn3d(h3, r['bn1_scale'], r['bn1_shift']), r['wc1'], None, 2))
    t = t.reshape(t.shape[0], t.shape[1], SEQ_LEN // 2, 2).mean(-1)       # AdaptiveAvgPool1d
    xc1 = leaky(conv1d(bn3d(t, r['bn2_scale'], r['bn2_shift']), r['wc2'], r['bc2'], 1))
    v = leaky(conv1d(bn3d(xc1, r['bn3_scale'], r['bn3_shift']), r['wc3'], r['bc3'], 1))
    w = leaky(conv1d(bn3d(v, r['bn4_scale'], r['bn4_shift']), r['wc4'], r['bc4'], 2))
    z = w * xc1
    B, C, L = z.shape
    zp = np.full((B, C, L + 2), -np.inf); zp[:, :, 1:L + 1] = z
    pooled = np.stack([zp[:, :, 2 * j:2 * j + 4].max(-1) for j in range(L // 2)], axis=-1)
    flat = pooled.reshape(B, -1)
    out = (flat * r['bn5_scale'] + r['bn5_shift']) @ r['wh'] + r['bh']
    return out[:, 0]


if __name__ == "__main__":
    key = jax.random.PRNGKey(0)
    pkey, xkey = jax.random.split(key)
    raw = init_raw_params(pkey)
    ops = build_operators(raw)
    x = jax.random.normal(xkey, (BATCH, INPUT_DIM), jnp.float32)

    fwd = jax.jit(functools.partial(one_d_cnn_forward, ops))
    out = fwd(x)
    jax.block_until_ready(out)

    assert out.shape == (BATCH,), out.shape
    out_np = np.asarray(out)
    assert np.all(np.isfinite(out_np))
    ref = reference_forward(raw, x)
    # bf16 matmul operands (f32 accumulate): 2e-2 tolerance has ample margin
    assert np.allclose(out_np, ref, rtol=2e-2, atol=2e-2), (out_np, ref)
    print("KERNEL_OK")
</pallas_src>

<mosaic_0001>
module attributes {stable_mosaic.version = 11 : i64} {
  func.func @fused_kernel(%arg0: memref<8x32xf32, #tpu.memory_space<vmem>>, %arg1: memref<544x128xbf16, #tpu.memory_space<vmem>>, %arg2: memref<8x128xf32, #tpu.memory_space<vmem>>, %arg3: memref<8x1xf32, #tpu.memory_space<vmem>>) attributes {dimension_semantics = [], scalar_prefetch = 0 : i64, scratch_operands = 0 : i64, tpu.core_type = #tpu.core_type<tc>} {
    %c0 = arith.constant 0 : index
    %c0_0 = arith.constant 0 : index
    %0 = vector.load %arg1[%c0, %c0_0] : memref<544x128xbf16, #tpu.memory_space<vmem>>, vector<32x128xbf16>
    %c32 = arith.constant 32 : index
    %c0_1 = arith.constant 0 : index
    %1 = vector.load %arg1[%c32, %c0_1] : memref<544x128xbf16, #tpu.memory_space<vmem>>, vector<128x128xbf16>
    %c160 = arith.constant 160 : index
    %c0_2 = arith.constant 0 : index
    %2 = vector.load %arg1[%c160, %c0_2] : memref<544x128xbf16, #tpu.memory_space<vmem>>, vector<128x128xbf16>
    %c288 = arith.constant 288 : index
    %c0_3 = arith.constant 0 : index
    %3 = vector.load %arg1[%c288, %c0_3] : memref<544x128xbf16, #tpu.memory_space<vmem>>, vector<128x128xbf16>
    %c416 = arith.constant 416 : index
    %c0_4 = arith.constant 0 : index
    %4 = vector.load %arg1[%c416, %c0_4] : memref<544x128xbf16, #tpu.memory_space<vmem>>, vector<128x128xbf16>
    %c0_5 = arith.constant 0 : index
    %c0_6 = arith.constant 0 : index
    %5 = vector.load %arg0[%c0_5, %c0_6] : memref<8x32xf32, #tpu.memory_space<vmem>>, vector<8x32xf32>
    %6 = arith.truncf %5 : vector<8x32xf32> to vector<8x32xbf16>
    %cst = arith.constant dense<0.000000e+00> : vector<8x128xf32>
    %7 = tpu.matmul %6, %0, %cst {dimension_numbers = #tpu.dot_dimension_numbers<[1], [0], [0], [1], [0, 0, 1, 1], [], []>} : vector<8x32xbf16>, vector<32x128xbf16>, vector<8x128xf32> -> vector<8x128xf32>
    %c0_7 = arith.constant 0 : index
    %c0_8 = arith.constant 0 : index
    %8 = vector.load %arg2[%c0_7, %c0_8] : memref<8x128xf32, #tpu.memory_space<vmem>>, vector<1x128xf32>
    %9 = vector.broadcast %8 : vector<1x128xf32> to vector<8x128xf32>
    %10 = arith.addf %7, %9 : vector<8x128xf32>
    %cst_9 = arith.constant 0.000000e+00 : f32
    %11 = vector.broadcast %cst_9 : f32 to vector<8x128xf32>
    %12 = arith.subf %11, %10 : vector<8x128xf32>
    %13 = math.exp %12 : vector<8x128xf32>
    %cst_10 = arith.constant 1.000000e+00 : f32
    %14 = vector.broadcast %cst_10 : f32 to vector<8x128xf32>
    %15 = arith.addf %14, %13 : vector<8x128xf32>
    %16 = tpu.reciprocal %15 {approx = true} : vector<8x128xf32> -> vector<8x128xf32>
    %17 = arith.mulf %10, %16 : vector<8x128xf32>
    %18 = arith.truncf %17 : vector<8x128xf32> to vector<8x128xbf16>
    %cst_11 = arith.constant dense<0.000000e+00> : vector<8x128xf32>
    %19 = tpu.matmul %18, %1, %cst_11 {dimension_numbers = #tpu.dot_dimension_numbers<[1], [0], [0], [1], [0, 0, 1, 1], [], []>} : vector<8x128xbf16>, vector<128x128xbf16>, vector<8x128xf32> -> vector<8x128xf32>
    %c1 = arith.constant 1 : index
    %c0_12 = arith.constant 0 : index
    %20 = vector.load %arg2[%c1, %c0_12] : memref<8x128xf32, #tpu.memory_space<vmem>>, vector<1x128xf32>
    %21 = vector.broadcast %20 : vector<1x128xf32> to vector<8x128xf32>
    %22 = arith.addf %19, %21 : vector<8x128xf32>
    %cst_13 = arith.constant 0.000000e+00 : f32
    %23 = vector.broadcast %cst_13 : f32 to vector<8x128xf32>
    %24 = arith.cmpf ogt, %22, %23 : vector<8x128xf32>
    %cst_14 = arith.constant 0.00999999977 : f32
    %25 = vector.broadcast %cst_14 : f32 to vector<8x128xf32>
    %26 = arith.mulf %25, %22 : vector<8x128xf32>
    %27 = arith.select %24, %22, %26 : vector<8x128xi1>, vector<8x128xf32>
    %28 = arith.truncf %27 : vector<8x128xf32> to vector<8x128xbf16>
    %cst_15 = arith.constant dense<0.000000e+00> : vector<8x128xf32>
    %29 = tpu.matmul %28, %2, %cst_15 {dimension_numbers = #tpu.dot_dimension_numbers<[1], [0], [0], [1], [0, 0, 1, 1], [], []>} : vector<8x128xbf16>, vector<128x128xbf16>, vector<8x128xf32> -> vector<8x128xf32>
    %c2 = arith.constant 2 : index
    %c0_16 = arith.constant 0 : index
    %30 = vector.load %arg2[%c2, %c0_16] : memref<8x128xf32, #tpu.memory_space<vmem>>, vector<1x128xf32>
    %31 = vector.broadcast %30 : vector<1x128xf32> to vector<8x128xf32>
    %32 = arith.addf %29, %31 : vector<8x128xf32>
    %cst_17 = arith.constant 0.000000e+00 : f32
    %33 = vector.broadcast %cst_17 : f32 to vector<8x128xf32>
    %34 = arith.cmpf ogt, %32, %33 : vector<8x128xf32>
    %cst_18 = arith.constant 0.00999999977 : f32
    %35 = vector.broadcast %cst_18 : f32 to vector<8x128xf32>
    %36 = arith.mulf %35, %32 : vector<8x128xf32>
    %37 = arith.select %34, %32, %36 : vector<8x128xi1>, vector<8x128xf32>
    %38 = arith.truncf %37 : vector<8x128xf32> to vector<8x128xbf16>
    %cst_19 = arith.constant dense<0.000000e+00> : vector<8x128xf32>
    %39 = tpu.matmul %38, %3, %cst_19 {dimension_numbers = #tpu.dot_dimension_numbers<[1], [0], [0], [1], [0, 0, 1, 1], [], []>} : vector<8x128xbf16>, vector<128x128xbf16>, vector<8x128xf32> -> vector<8x128xf32>
    %c3 = arith.constant 3 : index
    %c0_20 = arith.constant 0 : index
    %40 = vector.load %arg2[%c3, %c0_20] : memref<8x128xf32, #tpu.memory_space<vmem>>, vector<1x128xf32>
    %41 = vector.broadcast %40 : vector<1x128xf32> to vector<8x128xf32>
    %42 = arith.addf %39, %41 : vector<8x128xf32>
    %cst_21 = arith.constant 0.000000e+00 : f32
    %43 = vector.broadcast %cst_21 : f32 to vector<8x128xf32>
    %44 = arith.cmpf ogt, %42, %43 : vector<8x128xf32>
    %cst_22 = arith.constant 0.00999999977 : f32
    %45 = vector.broadcast %cst_22 : f32 to vector<8x128xf32>
    %46 = arith.mulf %45, %42 : vector<8x128xf32>
    %47 = arith.select %44, %42, %46 : vector<8x128xi1>, vector<8x128xf32>
    %48 = arith.truncf %47 : vector<8x128xf32> to vector<8x128xbf16>
    %cst_23 = arith.constant dense<0.000000e+00> : vector<8x128xf32>
    %49 = tpu.matmul %48, %4, %cst_23 {dimension_numbers = #tpu.dot_dimension_numbers<[1], [0], [0], [1], [0, 0, 1, 1], [], []>} : vector<8x128xbf16>, vector<128x128xbf16>, vector<8x128xf32> -> vector<8x128xf32>
    %c4 = arith.constant 4 : index
    %c0_24 = arith.constant 0 : index
    %50 = vector.load %arg2[%c4, %c0_24] : memref<8x128xf32, #tpu.memory_space<vmem>>, vector<1x128xf32>
    %51 = vector.broadcast %50 : vector<1x128xf32> to vector<8x128xf32>
    %52 = arith.addf %49, %51 : vector<8x128xf32>
    %cst_25 = arith.constant 0.000000e+00 : f32
    %53 = vector.broadcast %cst_25 : f32 to vector<8x128xf32>
    %54 = arith.cmpf ogt, %52, %53 : vector<8x128xf32>
    %cst_26 = arith.constant 0.00999999977 : f32
    %55 = vector.broadcast %cst_26 : f32 to vector<8x128xf32>
    %56 = arith.mulf %55, %52 : vector<8x128xf32>
    %57 = arith.select %54, %52, %56 : vector<8x128xi1>, vector<8x128xf32>
    %58 = arith.mulf %57, %37 : vector<8x128xf32>
    %59 = tpu.iota {dimensions = array<i32: 1>} : vector<1x128xi32>
    %c7_i32 = arith.constant 7 : i32
    %60 = vector.broadcast %c7_i32 : i32 to vector<1x128xi32>
    %61 = arith.andi %59, %60 : vector<1x128xi32>
    %c0_i32 = arith.constant 0 : i32
    %62 = vector.broadcast %c0_i32 : i32 to vector<1x128xi32>
    %63 = arith.cmpi eq, %61, %62 : vector<1x128xi32>
    %cst_27 = arith.constant -1.000000e+30 : f32
    %cst_28 = arith.constant 0.000000e+00 : f32
    %64 = vector.broadcast %cst_27 : f32 to vector<1x128xf32>
    %65 = vector.broadcast %cst_28 : f32 to vector<1x128xf32>
    %66 = arith.select %63, %64, %65 : vector<1x128xi1>, vector<1x128xf32>
    %c6_i32 = arith.constant 6 : i32
    %67 = vector.broadcast %c6_i32 : i32 to vector<1x128xi32>
    %68 = arith.cmpi sge, %61, %67 : vector<1x128xi32>
    %cst_29 = arith.constant -1.000000e+30 : f32
    %cst_30 = arith.constant 0.000000e+00 : f32
    %69 = vector.broadcast %cst_29 : f32 to vector<1x128xf32>
    %70 = vector.broadcast %cst_30 : f32 to vector<1x128xf32>
    %71 = arith.select %68, %69, %70 : vector<1x128xi1>, vector<1x128xf32>
    %c1_i32 = arith.constant 1 : i32
    %72 = tpu.dynamic_rotate %58 by %c1_i32 dim 1 : vector<8x128xf32>, i32 -> vector<8x128xf32>
    %73 = vector.broadcast %66 : vector<1x128xf32> to vector<8x128xf32>
    %74 = arith.addf %72, %73 : vector<8x128xf32>
    %c127_i32 = arith.constant 127 : i32
    %75 = tpu.dynamic_rotate %58 by %c127_i32 dim 1 : vector<8x128xf32>, i32 -> vector<8x128xf32>
    %c126_i32 = arith.constant 126 : i32
    %76 = tpu.dynamic_rotate %58 by %c126_i32 dim 1 : vector<8x128xf32>, i32 -> vector<8x128xf32>
    %77 = vector.broadcast %71 : vector<1x128xf32> to vector<8x128xf32>
    %78 = arith.addf %76, %77 : vector<8x128xf32>
    %79 = arith.maximumf %58, %75 : vector<8x128xf32>
    %80 = arith.maximumf %74, %78 : vector<8x128xf32>
    %81 = arith.maximumf %79, %80 : vector<8x128xf32>
    %c5 = arith.constant 5 : index
    %c0_31 = arith.constant 0 : index
    %82 = vector.load %arg2[%c5, %c0_31] : memref<8x128xf32, #tpu.memory_space<vmem>>, vector<1x128xf32>
    %83 = vector.broadcast %82 : vector<1x128xf32> to vector<8x128xf32>
    %84 = arith.mulf %81, %83 : vector<8x128xf32>
    %cst_32 = arith.constant dense<0.000000e+00> : vector<8xf32>
    %85 = vector.multi_reduction <add>, %84, %cst_32 [1] : vector<8x128xf32> to vector<8xf32>
    %86 = vector.shape_cast %85 : vector<8xf32> to vector<8x1xf32>
    %cst_33 = arith.constant -0.0217795521 : f32
    %87 = vector.broadcast %cst_33 : f32 to vector<8x1xf32>
    %88 = arith.addf %86, %87 : vector<8x1xf32>
    %c0_34 = arith.constant 0 : index
    %c0_35 = arith.constant 0 : index
    %89 = vector.load %arg3[%c0_34, %c0_35] : memref<8x1xf32, #tpu.memory_space<vmem>>, vector<8x1xf32>
    tpu.vector_store %arg3[%c0_34, %c0_35], %88 {strides = array<i32>} : memref<8x1xf32, #tpu.memory_space<vmem>>, vector<8x1xf32>,
    return
  }
}

</mosaic_0001>

<llo_original>
// kernel: one_d_cnn_forward.1
$region0: #{one_d_cnn_forward.1}
  #allocation0 [shape = 'u32[]', space=smem, size = 0x4, offset = 0x4, fixed_abs, tag = 'smem constant byte address 0x4 - core index']
  #allocation1 [shape = 'u32[72,128]{1,0:T(1,128)}', space=vmem, size = 0x9000, scoped, tag = 'internal scratch']
  %s0 = inlined_call_operand.vmem [shape: f32[8,32], index: 0, kind: input, shape index: {}]
  %s1 = inlined_call_operand.hbm [shape: bf16[544,128], index: 1, kind: input, shape index: {}]
  %s2 = inlined_call_operand.vmem [shape: f32[8,128], index: 2, kind: input, shape index: {}]
  %s3 = inlined_call_operand.vmem [shape: f32[8,1], index: 3, kind: output, shape index: {}]
  %s4 = sld [smem:[#allocation0]]
  $region26: #{one_d_cnn_forward.1} parent=0
    _
  %s6 = ssub.s32 1, %s4
  %s7 = scalar_select 0, %s6, %s4
  $region1: #{one_d_cnn_forward.1} parent=0
    #allocation2 [shape = 'u8[139264]{0}', space=vmem, size = 0x22000, scoped, tag = 'input window, operand 1, single buffered']
    #allocation3 [shape = 's32[1]{0}', space=sflag, size = 0x4, scoped, tag = 'scoped memory for one_d_cnn_forward.1']
    %8 = vsyncpa [#allocation3], 0
    // Predicated region
    $region2: #{one_d_cnn_forward.1} parent=1 // pred_check
      _
    $region3: #{one_d_cnn_forward.1} parent=1 // pred_check_branch
      %10 = sbr.rel (0) target = $region5
    $region4: #{one_d_cnn_forward.1} parent=1 // pred_region
      _
    $region5: #{one_d_cnn_forward.1} parent=1 // pred_fallthru
      _
    // Predicated region
    $region6: #{one_d_cnn_forward.1} parent=1 // pred_check
      _
    $region7: #{one_d_cnn_forward.1} parent=1 // pred_check_branch
      %12 = sbr.rel (0) target = $region9
    $region8: #{one_d_cnn_forward.1} parent=1 // pred_region
      %14 = vsyncadd [#allocation3], 0
      %s15 = sshll.u32 %s1, 4
      %s16 = int_to_ptr.hbm [resolvable:$true] %s15
      %s17 = sshll.u32 [#allocation2], 4
      %s18 = int_to_ptr.vmem [resolvable:$true] %s17
      %23 = dma.hbm_to_vmem [thread:$0]  %s16, 4352, %s18, [#allocation3], 64, 64, 4
    $region9: #{one_d_cnn_forward.1} parent=1 // pred_fallthru
      _
    // Predicated region
    $region10: #{one_d_cnn_forward.1} parent=1 // pred_check
      _
    $region11: #{one_d_cnn_forward.1} parent=1 // pred_check_branch
      %25 = sbr.rel (0) target = $region13
    $region12: #{one_d_cnn_forward.1} parent=1 // pred_region
      _
    $region13: #{one_d_cnn_forward.1} parent=1 // pred_fallthru
      _
    // Predicated region
    $region14: #{one_d_cnn_forward.1} parent=1 // pred_check
      _
    $region15: #{one_d_cnn_forward.1} parent=1 // pred_check_branch
      %27 = sbr.rel (0) target = $region17
    $region16: #{one_d_cnn_forward.1} parent=1 // pred_region
      %29 = dma.done [#allocation3], 4352
    $region17: #{one_d_cnn_forward.1} parent=1 // pred_fallthru
      _
    %v31 = vld [vmem:[#allocation2] sm:$0xf]
    %v32 = vld [vmem:[#allocation2 + $0x4] sm:$0xf]
    %v33 = vld [vmem:[#allocation2 + $0x8] sm:$0xf]
    %v34 = vld [vmem:[#allocation2 + $0xc] sm:$0xf]
    %v35 = vld [vmem:[#allocation2 + $0x10] sm:$0xf]
    %v36 = vld [vmem:[#allocation2 + $0x14] sm:$0xf]
    %v37 = vld [vmem:[#allocation2 + $0x18] sm:$0xf]
    %v38 = vld [vmem:[#allocation2 + $0x1c] sm:$0xf]
    %v39 = vld [vmem:[#allocation2 + $0x20] sm:$0xf]
    %v40 = vld [vmem:[#allocation2 + $0x24] sm:$0xf]
    %v41 = vld [vmem:[#allocation2 + $0x28] sm:$0xf]
    %v42 = vld [vmem:[#allocation2 + $0x2c] sm:$0xf]
    %v43 = vld [vmem:[#allocation2 + $0x30] sm:$0xf]
    %v44 = vld [vmem:[#allocation2 + $0x34] sm:$0xf]
    %v45 = vld [vmem:[#allocation2 + $0x38] sm:$0xf]
    %v46 = vld [vmem:[#allocation2 + $0x3c] sm:$0xf]
    %v47 = vld [vmem:[#allocation2 + $0x40] sm:$0xf]
    %v48 = vld [vmem:[#allocation2 + $0x44] sm:$0xf]
    %v49 = vld [vmem:[#allocation2 + $0x48] sm:$0xf]
    %v50 = vld [vmem:[#allocation2 + $0x4c] sm:$0xf]
    %v51 = vld [vmem:[#allocation2 + $0x50] sm:$0xf]
    %v52 = vld [vmem:[#allocation2 + $0x54] sm:$0xf]
    %v53 = vld [vmem:[#allocation2 + $0x58] sm:$0xf]
    %v54 = vld [vmem:[#allocation2 + $0x5c] sm:$0xf]
    %v55 = vld [vmem:[#allocation2 + $0x60] sm:$0xf]
    %v56 = vld [vmem:[#allocation2 + $0x64] sm:$0xf]
    %v57 = vld [vmem:[#allocation2 + $0x68] sm:$0xf]
    %v58 = vld [vmem:[#allocation2 + $0x6c] sm:$0xf]
    %v59 = vld [vmem:[#allocation2 + $0x70] sm:$0xf]
    %v60 = vld [vmem:[#allocation2 + $0x74] sm:$0xf]
    %v61 = vld [vmem:[#allocation2 + $0x78] sm:$0xf]
    %v62 = vld [vmem:[#allocation2 + $0x7c] sm:$0xf]
    %v63 = vld [vmem:[#allocation2 + $0x80] sm:$0xf]
    %v64 = vld [vmem:[#allocation2 + $0x84] sm:$0xf]
    %v65 = vld [vmem:[#allocation2 + $0x88] sm:$0xf]
    %v66 = vld [vmem:[#allocation2 + $0x8c] sm:$0xf]
    %v67 = vld [vmem:[#allocation2 + $0x90] sm:$0xf]
    %v68 = vld [vmem:[#allocation2 + $0x94] sm:$0xf]
    %v69 = vld [vmem:[#allocation2 + $0x98] sm:$0xf]
    %v70 = vld [vmem:[#allocation2 + $0x9c] sm:$0xf]
    %v71 = vld [vmem:[#allocation2 + $0xa0] sm:$0xf]
    %v72 = vld [vmem:[#allocation2 + $0xa4] sm:$0xf]
    %v73 = vld [vmem:[#allocation2 + $0xa8] sm:$0xf]
    %v74 = vld [vmem:[#allocation2 + $0xac] sm:$0xf]
    %v75 = vld [vmem:[#allocation2 + $0xb0] sm:$0xf]
    %v76 = vld [vmem:[#allocation2 + $0xb4] sm:$0xf]
    %v77 = vld [vmem:[#allocation2 + $0xb8] sm:$0xf]
    %v78 = vld [vmem:[#allocation2 + $0xbc] sm:$0xf]
    %v79 = vld [vmem:[#allocation2 + $0xc0] sm:$0xf]
    %v80 = vld [vmem:[#allocation2 + $0xc4] sm:$0xf]
    %v81 = vld [vmem:[#allocation2 + $0xc8] sm:$0xf]
    %v82 = vld [vmem:[#allocation2 + $0xcc] sm:$0xf]
    %v83 = vld [vmem:[#allocation2 + $0xd0] sm:$0xf]
    %v84 = vld [vmem:[#allocation2 + $0xd4] sm:$0xf]
    %v85 = vld [vmem:[#allocation2 + $0xd8] sm:$0xf]
    %v86 = vld [vmem:[#allocation2 + $0xdc] sm:$0xf]
    %v87 = vld [vmem:[#allocation2 + $0xe0] sm:$0xf]
    %v88 = vld [vmem:[#allocation2 + $0xe4] sm:$0xf]
    %v89 = vld [vmem:[#allocation2 + $0xe8] sm:$0xf]
    %v90 = vld [vmem:[#allocation2 + $0xec] sm:$0xf]
    %v91 = vld [vmem:[#allocation2 + $0xf0] sm:$0xf]
    %v92 = vld [vmem:[#allocation2 + $0xf4] sm:$0xf]
    %v93 = vld [vmem:[#allocation2 + $0xf8] sm:$0xf]
    %v94 = vld [vmem:[#allocation2 + $0xfc] sm:$0xf]
    %v95 = vld [vmem:[#allocation2 + $0x100] sm:$0xf]
    %v96 = vld [vmem:[#allocation2 + $0x104] sm:$0xf]
    %v97 = vld [vmem:[#allocation2 + $0x108] sm:$0xf]
    %v98 = vld [vmem:[#allocation2 + $0x10c] sm:$0xf]
    %v99 = vld [vmem:[%s0] sm:$0xff]
    %v100 = vpack.c.bf16 %v99, %v99
    %v101 = vld [vmem:[%s2] sm:$0x1]
    %v102 = vperm.slane %v101, 0
    %v107 = vunpack.c.l.b16 %v31
    %v108 = vunpack.c.l.b16 %v32
    %v109 = vunpack.c.l.b16 %v33
    %v110 = vunpack.c.l.b16 %v34
    %v111 = vpack.c.b16 %v108, %v107
    %v112 = vpack.c.b16 %v110, %v109
    %vm115 = vcmask 261120
    %v117 = vsel %vm115, %v100, 0
    %119 = vmatpush.bf16.msra.mxu0 0
    %120 = vmatpush.bf16.msra.mxu0 0
    %121 = vmatpush.bf16.msra.mxu0 0
    %122 = vmatpush.bf16.msra.mxu0 0
    %123 = vmatpush.bf16.msra.mxu0 0
    %124 = vmatpush.bf16.msra.mxu0 0
    %125 = vmatpush.bf16.msra.mxu0 %v112
    %126 = vmatpush.bf16.msra.mxu0 %v111
    %127 = vmatmul.bf16.gmra.mxu0 %v117
    %v128 = vpop.f32.mrf.mxu0
    %v129 = vadd.f32 %v102, %v128
    %v130 = vpop.f32.mrf.mxu0
    %131 = vdwg.mxu0
    %v132 = vsub.f32 0.0, %v129
    %v133 = vmul.f32 %v132, 1.442695
    %v134 = vpow.pop %v133
    %v135 = vadd.f32 %v134, 1.0
    %v136 = vrcp.pop %v135
    %v137 = vmul.f32 %v129, %v136
    %v138 = vpack.c.bf16 %v137, %v137
    %v139 = vld [vmem:[%s2 + $0x1] sm:$0x1]
    %v140 = vperm.slane %v139, 0
    %v157 = vunpack.c.l.b16 %v35
    %v158 = vunpack.c.l.b16 %v36
    %v159 = vunpack.c.l.b16 %v37
    %v160 = vunpack.c.l.b16 %v38
    %v161 = vunpack.c.l.b16 %v39
    %v162 = vunpack.c.l.b16 %v40
    %v163 = vunpack.c.l.b16 %v41
    %v164 = vunpack.c.l.b16 %v42
    %v165 = vunpack.c.l.b16 %v43
    %v166 = vunpack.c.l.b16 %v44
    %v167 = vunpack.c.l.b16 %v45
    %v168 = vunpack.c.l.b16 %v46
    %v169 = vunpack.c.l.b16 %v47
    %v170 = vunpack.c.l.b16 %v48
    %v171 = vunpack.c.l.b16 %v49
    %v172 = vunpack.c.l.b16 %v50
    %v173 = vpack.c.b16 %v158, %v157
    %v174 = vpack.c.b16 %v160, %v159
    %v175 = vpack.c.b16 %v162, %v161
    %v176 = vpack.c.b16 %v164, %v163
    %v177 = vpack.c.b16 %v166, %v165
    %v178 = vpack.c.b16 %v168, %v167
    %v179 = vpack.c.b16 %v170, %v169
    %v180 = vpack.c.b16 %v172, %v171
    %189 = vmatpush.bf16.msra.mxu0 %v180
    %190 = vmatpush.bf16.msra.mxu0 %v179
    %191 = vmatpush.bf16.msra.mxu0 %v178
    %192 = vmatpush.bf16.msra.mxu0 %v177
    %193 = vmatpush.bf16.msra.mxu0 %v176
    %194 = vmatpush.bf16.msra.mxu0 %v175
    %195 = vmatpush.bf16.msra.mxu0 %v174
    %196 = vmatpush.bf16.msra.mxu0 %v173
    %197 = vmatmul.bf16.gmra.mxu0 %v138
    %v198 = vpop.f32.mrf.mxu0
    %v199 = vadd.f32 %v140, %v198
    %v200 = vpop.f32.mrf.mxu0
    %201 = vdwg.mxu0
    %vm202 = vcmp.gt.f32.partialorder %v199, 0.0
    %v203 = vmul.f32 %v199, 0.01
    %v204 = vsel %vm202, %v199, %v203
    %v205 = vpack.c.bf16 %v204, %v204
    %v206 = vld [vmem:[%s2 + $0x2] sm:$0x1]
    %v207 = vperm.slane %v206, 0
    %v224 = vunpack.c.l.b16 %v51
    %v225 = vunpack.c.l.b16 %v52
    %v226 = vunpack.c.l.b16 %v53
    %v227 = vunpack.c.l.b16 %v54
    %v228 = vunpack.c.l.b16 %v55
    %v229 = vunpack.c.l.b16 %v56
    %v230 = vunpack.c.l.b16 %v57
    %v231 = vunpack.c.l.b16 %v58
    %v232 = vunpack.c.l.b16 %v59
    %v233 = vunpack.c.l.b16 %v60
    %v234 = vunpack.c.l.b16 %v61
    %v235 = vunpack.c.l.b16 %v62
    %v236 = vunpack.c.l.b16 %v63
    %v237 = vunpack.c.l.b16 %v64
    %v238 = vunpack.c.l.b16 %v65
    %v239 = vunpack.c.l.b16 %v66
    %v240 = vpack.c.b16 %v225, %v224
    %v241 = vpack.c.b16 %v227, %v226
    %v242 = vpack.c.b16 %v229, %v228
    %v243 = vpack.c.b16 %v231, %v230
    %v244 = vpack.c.b16 %v233, %v232
    %v245 = vpack.c.b16 %v235, %v234
    %v246 = vpack.c.b16 %v237, %v236
    %v247 = vpack.c.b16 %v239, %v238
    %256 = vmatpush.bf16.msra.mxu0 %v247
    %257 = vmatpush.bf16.msra.mxu0 %v246
    %258 = vmatpush.bf16.msra.mxu0 %v245
    %259 = vmatpush.bf16.msra.mxu0 %v244
    %260 = vmatpush.bf16.msra.mxu0 %v243
    %261 = vmatpush.bf16.msra.mxu0 %v242
    %262 = vmatpush.bf16.msra.mxu0 %v241
    %263 = vmatpush.bf16.msra.mxu0 %v240
    %264 = vmatmul.bf16.gmra.mxu0 %v205
    %v265 = vpop.f32.mrf.mxu0
    %v266 = vadd.f32 %v207, %v265
    %v267 = vpop.f32.mrf.mxu0
    %268 = vdwg.mxu0
    %vm269 = vcmp.gt.f32.partialorder %v266, 0.0
    %v270 = vmul.f32 %v266, 0.01
    %v271 = vsel %vm269, %v266, %v270
    %v272 = vpack.c.bf16 %v271, %v271
    %v273 = vld [vmem:[%s2 + $0x3] sm:$0x1]
    %v274 = vperm.slane %v273, 0
    %v291 = vunpack.c.l.b16 %v67
    %v292 = vunpack.c.l.b16 %v68
    %v293 = vunpack.c.l.b16 %v69
    %v294 = vunpack.c.l.b16 %v70
    %v295 = vunpack.c.l.b16 %v71
    %v296 = vunpack.c.l.b16 %v72
    %v297 = vunpack.c.l.b16 %v73
    %v298 = vunpack.c.l.b16 %v74
    %v299 = vunpack.c.l.b16 %v75
    %v300 = vunpack.c.l.b16 %v76
    %v301 = vunpack.c.l.b16 %v77
    %v302 = vunpack.c.l.b16 %v78
    %v303 = vunpack.c.l.b16 %v79
    %v304 = vunpack.c.l.b16 %v80
    %v305 = vunpack.c.l.b16 %v81
    %v306 = vunpack.c.l.b16 %v82
    %v307 = vpack.c.b16 %v292, %v291
    %v308 = vpack.c.b16 %v294, %v293
    %v309 = vpack.c.b16 %v296, %v295
    %v310 = vpack.c.b16 %v298, %v297
    %v311 = vpack.c.b16 %v300, %v299
    %v312 = vpack.c.b16 %v302, %v301
    %v313 = vpack.c.b16 %v304, %v303
    %v314 = vpack.c.b16 %v306, %v305
    %323 = vmatpush.bf16.msra.mxu0 %v314
    %324 = vmatpush.bf16.msra.mxu0 %v313
    %325 = vmatpush.bf16.msra.mxu0 %v312
    %326 = vmatpush.bf16.msra.mxu0 %v311
    %327 = vmatpush.bf16.msra.mxu0 %v310
    %328 = vmatpush.bf16.msra.mxu0 %v309
    %329 = vmatpush.bf16.msra.mxu0 %v308
    %330 = vmatpush.bf16.msra.mxu0 %v307
    %331 = vmatmul.bf16.gmra.mxu0 %v272
    %v332 = vpop.f32.mrf.mxu0
    %v333 = vadd.f32 %v274, %v332
    %v334 = vpop.f32.mrf.mxu0
    %335 = vdwg.mxu0
    %vm336 = vcmp.gt.f32.partialorder %v333, 0.0
    %v337 = vmul.f32 %v333, 0.01
    %v338 = vsel %vm336, %v333, %v337
    %v339 = vpack.c.bf16 %v338, %v338
    %v340 = vld [vmem:[%s2 + $0x4] sm:$0x1]
    %v341 = vperm.slane %v340, 0
    %v358 = vunpack.c.l.b16 %v83
    %v359 = vunpack.c.l.b16 %v84
    %v360 = vunpack.c.l.b16 %v85
    %v361 = vunpack.c.l.b16 %v86
    %v362 = vunpack.c.l.b16 %v87
    %v363 = vunpack.c.l.b16 %v88
    %v364 = vunpack.c.l.b16 %v89
    %v365 = vunpack.c.l.b16 %v90
    %v366 = vunpack.c.l.b16 %v91
    %v367 = vunpack.c.l.b16 %v92
    %v368 = vunpack.c.l.b16 %v93
    %v369 = vunpack.c.l.b16 %v94
    %v370 = vunpack.c.l.b16 %v95
    %v371 = vunpack.c.l.b16 %v96
    %v372 = vunpack.c.l.b16 %v97
    %v373 = vunpack.c.l.b16 %v98
    %v374 = vpack.c.b16 %v359, %v358
    %v375 = vpack.c.b16 %v361, %v360
    %v376 = vpack.c.b16 %v363, %v362
    %v377 = vpack.c.b16 %v365, %v364
    %v378 = vpack.c.b16 %v367, %v366
    %v379 = vpack.c.b16 %v369, %v368
    %v380 = vpack.c.b16 %v371, %v370
    %v381 = vpack.c.b16 %v373, %v372
    %390 = vmatpush.bf16.msra.mxu0 %v381
    %391 = vmatpush.bf16.msra.mxu0 %v380
    %392 = vmatpush.bf16.msra.mxu0 %v379
    %393 = vmatpush.bf16.msra.mxu0 %v378
    %394 = vmatpush.bf16.msra.mxu0 %v377
    %395 = vmatpush.bf16.msra.mxu0 %v376
    %396 = vmatpush.bf16.msra.mxu0 %v375
    %397 = vmatpush.bf16.msra.mxu0 %v374
    %398 = vmatmul.bf16.gmra.mxu0 %v339
    %v399 = vpop.f32.mrf.mxu0
    %v400 = vadd.f32 %v341, %v399
    %v401 = vpop.f32.mrf.mxu0
    %402 = vdwg.mxu0
    %vm403 = vcmp.gt.f32.partialorder %v400, 0.0
    %v404 = vmul.f32 %v400, 0.01
    %v405 = vsel %vm403, %v400, %v404
    %v406 = vmul.f32 %v405, %v271
    %v407 = vlaneseq
    %v408 = vand.u32 %v407, 127
    %v409 = vand.u32 %v408, 7
    %vm410 = vcmp.eq.s32.totalorder %v409, 0
    %v411 = vsel %vm410, -1e+30, 0.0
    %vm412 = vcmp.ge.s32.totalorder %v409, 6
    %v413 = vsel %vm412, -1e+30, 0.0
    %414 = vrot.lane.b32.xlu0 %v406, 1
    %v415 = vpop.permute.xlu0 %414
    %v416 = vadd.f32 %v415, %v411
    %417 = vrot.lane.b32.xlu0 %v406, 127
    %v418 = vpop.permute.xlu0 %417
    %419 = vrot.lane.b32.xlu0 %v406, 126
    %v420 = vpop.permute.xlu0 %419
    %v421 = vadd.f32 %v420, %v413
    %v422 = vmax.f32 %v406, %v418
    %v423 = vmax.f32 %v416, %v421
    %v424 = vmax.f32 %v422, %v423
    %v425 = vld [vmem:[%s2 + $0x5] sm:$0x1]
    %v426 = vperm.slane %v425, 0
    %v427 = vmul.f32 %v424, %v426
    %428 = vadd.xlane.f32.xlu0 %v427
    %v429 = vpop.xlane.xlu0 %428
    %v430 = vadd.f32 %v429, -0.021779552
    %vm431 = vcmask 7168
    %432 = vst.msk [vmem:[%s3] sm:$0xff] %vm431, %v430
    // Predicated region
    $region18: #{one_d_cnn_forward.1} parent=1 // pred_check
      _
    $region19: #{one_d_cnn_forward.1} parent=1 // pred_check_branch
      %434 = sbr.rel (0) target = $region21
    $region20: #{one_d_cnn_forward.1} parent=1 // pred_region
      _
    $region21: #{one_d_cnn_forward.1} parent=1 // pred_fallthru
      _
    // Predicated region
    $region22: #{one_d_cnn_forward.1} parent=1 // pred_check
      _
    $region23: #{one_d_cnn_forward.1} parent=1 // pred_check_branch
      %436 = sbr.rel (0) target = $region25
    $region24: #{one_d_cnn_forward.1} parent=1 // pred_region
      _
    $region25: #{one_d_cnn_forward.1} parent=1 // pred_fallthru
      _
    %437 = vsyncpa [#allocation3], 1

</llo_original>
